<compile_context>
chip_gen: v5e
topology: v5e:2x2
jax: 0.10.0
libtpu: 0.0.40
codegen_flags: <defaults>
</compile_context>

<pallas_src>
import math
from functools import partial

import jax
import jax.numpy as jnp
from jax import lax
from jax.experimental import pallas as pl
from jax.experimental.pallas import tpu as pltpu

# -------------------- model config (small, consistent with the module) --------------------
BATCH = 2
SEQ = 8
D_MODEL = 32
NUM_HEADS = 4
HEAD_DIM = D_MODEL // NUM_HEADS


# -------------------- Pallas kernel: single invocation, whole problem in VMEM --------------------
def _mhca_kernel(*refs, with_mask, batch, seq, num_heads, head_dim):
    if with_mask:
        (x_ref, y_ref, mask_ref,
         wk_ref, bk_ref, wv_ref, bv_ref, wq_ref, bq_ref, wo_ref, bo_ref,
         out_ref, values_ref) = refs
    else:
        (x_ref, y_ref,
         wk_ref, bk_ref, wv_ref, bv_ref, wq_ref, bq_ref, wo_ref, bo_ref,
         out_ref, values_ref) = refs
        mask_ref = None

    x = x_ref[...]                       # (B*S, D)  -- kv source ("x" in the module)
    y = y_ref[...]                       # (B*S, D)  -- query source ("y" in the module)

    # Projections for ALL batch rows at once (hot path: MXU matmuls, f32 accumulation).
    # K / V weights are pre-split and head-major, so k[:, h*hd:(h+1)*hd] is head h's K.
    k = jnp.dot(x, wk_ref[...], preferred_element_type=jnp.float32) + bk_ref[...]   # (B*S, D)
    v = jnp.dot(x, wv_ref[...], preferred_element_type=jnp.float32) + bv_ref[...]   # (B*S, D)
    # 1/sqrt(head_dim) is already folded into wq/bq by the wrapper.
    q = jnp.dot(y, wq_ref[...], preferred_element_type=jnp.float32) + bq_ref[...]   # (B*S, D)

    if with_mask:
        mask = mask_ref[...]             # (S, S) additive mask

    for b in range(batch):               # static unrolled loops (B=2, H=4)
        r0 = b * seq
        q_b = q[r0:r0 + seq]
        k_b = k[r0:r0 + seq]
        v_b = v[r0:r0 + seq]
        for h in range(num_heads):
            c0 = h * head_dim
            q_h = q_b[:, c0:c0 + head_dim]                       # (S, hd)
            k_h = k_b[:, c0:c0 + head_dim]                       # (S, hd)
            v_h = v_b[:, c0:c0 + head_dim]                       # (S, hd)

            # q @ k^T without materializing a transpose: contract last dims.
            scores = lax.dot_general(
                q_h, k_h, (((1,), (1,)), ((), ())),
                preferred_element_type=jnp.float32)              # (S, S)
            if with_mask:
                scores = scores + mask

            # softmax along last axis (max-subtracted for stability; math unchanged)
            scores = scores - jnp.max(scores, axis=-1, keepdims=True)
            p = jnp.exp(scores)
            attn = p * pl.reciprocal(jnp.sum(p, axis=-1, keepdims=True), approx=True)

            # Write this head's output into the values slab at static offsets
            # (replaces jnp.concatenate over heads).
            values_ref[r0:r0 + seq, c0:c0 + head_dim] = jnp.dot(
                attn, v_h, preferred_element_type=jnp.float32)   # (S, hd)

    out = jnp.dot(values_ref[...], wo_ref[...],
                  preferred_element_type=jnp.float32) + bo_ref[...]                  # (B*S, D)
    out_ref[...] = out.astype(out_ref.dtype)


# -------------------- wrapper --------------------
def multihead_cross_attention(x, y, params, mask=None, compute_dtype=jnp.float32):
    B, S, D = x.shape
    H = NUM_HEADS
    hd = D // H
    wkv, bkv, wq, bq, wo, bo = params

    # Split the fused kv projection into contiguous, head-major K and V projections.
    # Pure layout plumbing at trace time; exactly matches PyTorch's
    # reshape(B, S, H, 2*hd) + chunk(2, dim=-1).
    wk = wkv.reshape(D, H, 2, hd)[:, :, 0, :].reshape(D, D)
    wv = wkv.reshape(D, H, 2, hd)[:, :, 1, :].reshape(D, D)
    bk = bkv.reshape(1, H, 2, hd)[:, :, 0, :].reshape(1, D)
    bv = bkv.reshape(1, H, 2, hd)[:, :, 1, :].reshape(1, D)

    # Fold the 1/sqrt(head_dim) score scale into the query projection (exact).
    scale = 1.0 / math.sqrt(hd)
    wq_s = wq * scale
    bq_s = bq * scale

    # Optional bf16 MXU operands (v6e/v7x bandwidth win); accumulation / softmax stay f32.
    cast = lambda a: a.astype(compute_dtype)

    args = [cast(x.reshape(B * S, D)), cast(y.reshape(B * S, D))]
    if mask is not None:
        args.append(mask.astype(jnp.float32))
    args += [cast(wk), cast(bk), cast(wv), cast(bv),
             cast(wq_s), cast(bq_s), cast(wo), cast(bo)]

    kernel = partial(_mhca_kernel, with_mask=mask is not None,
                     batch=B, seq=S, num_heads=H, head_dim=hd)

    # Single invocation, whole (tiny) problem resident in VMEM; no grid pipeline overhead.
    # TODO(synk): at realistic sizes (S in the hundreds, D >= 256) restructure to a
    # flash-style (q-tile, kv-tile) grid with an accumulator scratch.
    out = pl.pallas_call(
        kernel,
        out_shape=jax.ShapeDtypeStruct((B * S, D), jnp.float32),
        scratch_shapes=[pltpu.VMEM((B * S, D), jnp.float32)],   # per-head "values" slab
    )(*args)
    return out.reshape(B, S, D)


# -------------------- pure-JAX reference (mirrors the PyTorch forward) --------------------
def reference_forward(x, y, params, mask=None):
    wkv, bkv, wq, bq, wo, bo = params
    B, S, D = x.shape
    kv = x @ wkv + bkv                                   # (B, S, 2D)
    q = y @ wq + bq                                      # (B, S, D)
    kv = kv.reshape(B, S, NUM_HEADS, 2 * HEAD_DIM).transpose(0, 2, 1, 3)
    q = q.reshape(B, S, NUM_HEADS, HEAD_DIM).transpose(0, 2, 1, 3)
    k, v = kv[..., :HEAD_DIM], kv[..., HEAD_DIM:]
    scaled = jnp.einsum("bhqd,bhkd->bhqk", q, k) / math.sqrt(HEAD_DIM)
    if mask is not None:
        scaled = scaled + mask
    attn = jax.nn.softmax(scaled, axis=-1)
    vals = jnp.einsum("bhqk,bhkd->bhqd", attn, v)
    vals = vals.transpose(0, 2, 1, 3).reshape(B, S, D)
    return vals @ wo + bo


# -------------------- deterministic parameter init --------------------
def init_params(key):
    ks = jax.random.split(key, 6)
    # Linear(d_model, 2*d_model), Linear(d_model, d_model), Linear(d_model, d_model)
    wkv = jax.random.normal(ks[0], (D_MODEL, 2 * D_MODEL), jnp.float32) * 0.05
    bkv = jax.random.normal(ks[1], (1, 2 * D_MODEL), jnp.float32) * 0.05
    wq = jax.random.normal(ks[2], (D_MODEL, D_MODEL), jnp.float32) * 0.05
    bq = jax.random.normal(ks[3], (1, D_MODEL), jnp.float32) * 0.05
    wo = jax.random.normal(ks[4], (D_MODEL, D_MODEL), jnp.float32) * 0.05
    bo = jax.random.normal(ks[5], (1, D_MODEL), jnp.float32) * 0.05
    return (wkv, bkv, wq, bq, wo, bo)


if __name__ == "__main__":
    key = jax.random.PRNGKey(0)
    kx, ky, kp = jax.random.split(key, 3)
    x = jax.random.normal(kx, (BATCH, SEQ, D_MODEL), jnp.float32)
    y = jax.random.normal(ky, (BATCH, SEQ, D_MODEL), jnp.float32)
    params = init_params(kp)

    # mask=None fast path (specialized kernel: no mask DMA, no mask add)
    out = jax.block_until_ready(multihead_cross_attention(x, y, params, mask=None))
    ref = reference_forward(x, y, params, mask=None)
    assert out.shape == (BATCH, SEQ, D_MODEL)
    # approx reciprocal in the softmax normalizer -> slightly looser tolerance
    assert jnp.allclose(out, ref, atol=5e-3, rtol=5e-3), "mismatch vs reference (mask=None)"

    # masked path (additive upper-triangular mask, as in the decoder spec)
    mask = jnp.triu(jnp.full((SEQ, SEQ), -1e9, jnp.float32), k=1)
    out_m = jax.block_until_ready(multihead_cross_attention(x, y, params, mask=mask))
    ref_m = reference_forward(x, y, params, mask=mask)
    assert jnp.allclose(out_m, ref_m, atol=5e-3, rtol=5e-3), "mismatch vs reference (masked)"

    print("KERNEL_OK")
</pallas_src>

<mosaic_0001>
module attributes {stable_mosaic.version = 11 : i64} {
  func.func @_mhca_kernel(%arg0: memref<16x32xf32, #tpu.memory_space<vmem>>, %arg1: memref<16x32xf32, #tpu.memory_space<vmem>>, %arg2: memref<32x32xf32, #tpu.memory_space<vmem>>, %arg3: memref<1x32xf32, #tpu.memory_space<vmem>>, %arg4: memref<32x32xf32, #tpu.memory_space<vmem>>, %arg5: memref<1x32xf32, #tpu.memory_space<vmem>>, %arg6: memref<32x32xf32, #tpu.memory_space<vmem>>, %arg7: memref<1x32xf32, #tpu.memory_space<vmem>>, %arg8: memref<32x32xf32, #tpu.memory_space<vmem>>, %arg9: memref<1x32xf32, #tpu.memory_space<vmem>>, %arg10: memref<16x32xf32, #tpu.memory_space<vmem>>, %arg11: memref<16x32xf32, #tpu.memory_space<vmem>>) attributes {dimension_semantics = [], scalar_prefetch = 0 : i64, scratch_operands = 1 : i64, tpu.core_type = #tpu.core_type<tc>} {
    %c0 = arith.constant 0 : index
    %c0_0 = arith.constant 0 : index
    %0 = vector.load %arg0[%c0, %c0_0] : memref<16x32xf32, #tpu.memory_space<vmem>>, vector<16x32xf32>
    %c0_1 = arith.constant 0 : index
    %c0_2 = arith.constant 0 : index
    %1 = vector.load %arg1[%c0_1, %c0_2] : memref<16x32xf32, #tpu.memory_space<vmem>>, vector<16x32xf32>
    %c0_3 = arith.constant 0 : index
    %c0_4 = arith.constant 0 : index
    %2 = vector.load %arg2[%c0_3, %c0_4] : memref<32x32xf32, #tpu.memory_space<vmem>>, vector<32x32xf32>
    %cst = arith.constant dense<0.000000e+00> : vector<16x32xf32>
    %3 = tpu.matmul %0, %2, %cst {dimension_numbers = #tpu.dot_dimension_numbers<[1], [0], [0], [1], [0, 0, 1, 1], [], []>} : vector<16x32xf32>, vector<32x32xf32>, vector<16x32xf32> -> vector<16x32xf32>
    %c0_5 = arith.constant 0 : index
    %c0_6 = arith.constant 0 : index
    %4 = vector.load %arg3[%c0_5, %c0_6] : memref<1x32xf32, #tpu.memory_space<vmem>>, vector<1x32xf32>
    %5 = vector.broadcast %4 : vector<1x32xf32> to vector<16x32xf32>
    %6 = arith.addf %3, %5 : vector<16x32xf32>
    %c0_7 = arith.constant 0 : index
    %c0_8 = arith.constant 0 : index
    %7 = vector.load %arg4[%c0_7, %c0_8] : memref<32x32xf32, #tpu.memory_space<vmem>>, vector<32x32xf32>
    %cst_9 = arith.constant dense<0.000000e+00> : vector<16x32xf32>
    %8 = tpu.matmul %0, %7, %cst_9 {dimension_numbers = #tpu.dot_dimension_numbers<[1], [0], [0], [1], [0, 0, 1, 1], [], []>} : vector<16x32xf32>, vector<32x32xf32>, vector<16x32xf32> -> vector<16x32xf32>
    %c0_10 = arith.constant 0 : index
    %c0_11 = arith.constant 0 : index
    %9 = vector.load %arg5[%c0_10, %c0_11] : memref<1x32xf32, #tpu.memory_space<vmem>>, vector<1x32xf32>
    %10 = vector.broadcast %9 : vector<1x32xf32> to vector<16x32xf32>
    %11 = arith.addf %8, %10 : vector<16x32xf32>
    %c0_12 = arith.constant 0 : index
    %c0_13 = arith.constant 0 : index
    %12 = vector.load %arg6[%c0_12, %c0_13] : memref<32x32xf32, #tpu.memory_space<vmem>>, vector<32x32xf32>
    %cst_14 = arith.constant dense<0.000000e+00> : vector<16x32xf32>
    %13 = tpu.matmul %1, %12, %cst_14 {dimension_numbers = #tpu.dot_dimension_numbers<[1], [0], [0], [1], [0, 0, 1, 1], [], []>} : vector<16x32xf32>, vector<32x32xf32>, vector<16x32xf32> -> vector<16x32xf32>
    %c0_15 = arith.constant 0 : index
    %c0_16 = arith.constant 0 : index
    %14 = vector.load %arg7[%c0_15, %c0_16] : memref<1x32xf32, #tpu.memory_space<vmem>>, vector<1x32xf32>
    %15 = vector.broadcast %14 : vector<1x32xf32> to vector<16x32xf32>
    %16 = arith.addf %13, %15 : vector<16x32xf32>
    %17 = vector.extract_strided_slice %16 {offsets = [0, 0], sizes = [8, 32], strides = [1, 1]} : vector<16x32xf32> to vector<8x32xf32>
    %18 = vector.extract_strided_slice %6 {offsets = [0, 0], sizes = [8, 32], strides = [1, 1]} : vector<16x32xf32> to vector<8x32xf32>
    %19 = vector.extract_strided_slice %11 {offsets = [0, 0], sizes = [8, 32], strides = [1, 1]} : vector<16x32xf32> to vector<8x32xf32>
    %20 = vector.extract_strided_slice %17 {offsets = [0, 0], sizes = [8, 8], strides = [1, 1]} : vector<8x32xf32> to vector<8x8xf32>
    %21 = vector.extract_strided_slice %18 {offsets = [0, 0], sizes = [8, 8], strides = [1, 1]} : vector<8x32xf32> to vector<8x8xf32>
    %22 = vector.extract_strided_slice %19 {offsets = [0, 0], sizes = [8, 8], strides = [1, 1]} : vector<8x32xf32> to vector<8x8xf32>
    %cst_17 = arith.constant dense<0.000000e+00> : vector<8x8xf32>
    %23 = tpu.matmul %20, %21, %cst_17 {dimension_numbers = #tpu.dot_dimension_numbers<[1], [1], [0], [0], [0, 0, 1, 0], [], []>} : vector<8x8xf32>, vector<8x8xf32>, vector<8x8xf32> -> vector<8x8xf32>
    %cst_18 = arith.constant dense<0xFF800000> : vector<8xf32>
    %24 = vector.multi_reduction <maximumf>, %23, %cst_18 [1] : vector<8x8xf32> to vector<8xf32>
    %25 = vector.shape_cast %24 : vector<8xf32> to vector<8x1xf32>
    %26 = vector.broadcast %25 : vector<8x1xf32> to vector<8x8xf32>
    %27 = arith.subf %23, %26 : vector<8x8xf32>
    %28 = math.exp %27 : vector<8x8xf32>
    %cst_19 = arith.constant dense<0.000000e+00> : vector<8xf32>
    %29 = vector.multi_reduction <add>, %28, %cst_19 [1] : vector<8x8xf32> to vector<8xf32>
    %30 = vector.shape_cast %29 : vector<8xf32> to vector<8x1xf32>
    %31 = tpu.reciprocal %30 {approx = true} : vector<8x1xf32> -> vector<8x1xf32>
    %32 = vector.broadcast %31 : vector<8x1xf32> to vector<8x8xf32>
    %33 = arith.mulf %28, %32 : vector<8x8xf32>
    %cst_20 = arith.constant dense<0.000000e+00> : vector<8x8xf32>
    %34 = tpu.matmul %33, %22, %cst_20 {dimension_numbers = #tpu.dot_dimension_numbers<[1], [0], [0], [1], [0, 0, 1, 1], [], []>} : vector<8x8xf32>, vector<8x8xf32>, vector<8x8xf32> -> vector<8x8xf32>
    %c0_21 = arith.constant 0 : index
    %c0_22 = arith.constant 0 : index
    %35 = vector.load %arg11[%c0_21, %c0_22] : memref<16x32xf32, #tpu.memory_space<vmem>>, vector<8x8xf32>
    tpu.vector_store %arg11[%c0_21, %c0_22], %34 {strides = array<i32>} : memref<16x32xf32, #tpu.memory_space<vmem>>, vector<8x8xf32>,
    %36 = vector.extract_strided_slice %17 {offsets = [0, 8], sizes = [8, 8], strides = [1, 1]} : vector<8x32xf32> to vector<8x8xf32>
    %37 = vector.extract_strided_slice %18 {offsets = [0, 8], sizes = [8, 8], strides = [1, 1]} : vector<8x32xf32> to vector<8x8xf32>
    %38 = vector.extract_strided_slice %19 {offsets = [0, 8], sizes = [8, 8], strides = [1, 1]} : vector<8x32xf32> to vector<8x8xf32>
    %cst_23 = arith.constant dense<0.000000e+00> : vector<8x8xf32>
    %39 = tpu.matmul %36, %37, %cst_23 {dimension_numbers = #tpu.dot_dimension_numbers<[1], [1], [0], [0], [0, 0, 1, 0], [], []>} : vector<8x8xf32>, vector<8x8xf32>, vector<8x8xf32> -> vector<8x8xf32>
    %cst_24 = arith.constant dense<0xFF800000> : vector<8xf32>
    %40 = vector.multi_reduction <maximumf>, %39, %cst_24 [1] : vector<8x8xf32> to vector<8xf32>
    %41 = vector.shape_cast %40 : vector<8xf32> to vector<8x1xf32>
    %42 = vector.broadcast %41 : vector<8x1xf32> to vector<8x8xf32>
    %43 = arith.subf %39, %42 : vector<8x8xf32>
    %44 = math.exp %43 : vector<8x8xf32>
    %cst_25 = arith.constant dense<0.000000e+00> : vector<8xf32>
    %45 = vector.multi_reduction <add>, %44, %cst_25 [1] : vector<8x8xf32> to vector<8xf32>
    %46 = vector.shape_cast %45 : vector<8xf32> to vector<8x1xf32>
    %47 = tpu.reciprocal %46 {approx = true} : vector<8x1xf32> -> vector<8x1xf32>
    %48 = vector.broadcast %47 : vector<8x1xf32> to vector<8x8xf32>
    %49 = arith.mulf %44, %48 : vector<8x8xf32>
    %cst_26 = arith.constant dense<0.000000e+00> : vector<8x8xf32>
    %50 = tpu.matmul %49, %38, %cst_26 {dimension_numbers = #tpu.dot_dimension_numbers<[1], [0], [0], [1], [0, 0, 1, 1], [], []>} : vector<8x8xf32>, vector<8x8xf32>, vector<8x8xf32> -> vector<8x8xf32>
    %c0_27 = arith.constant 0 : index
    %c8 = arith.constant 8 : index
    %51 = vector.load %arg11[%c0_27, %c8] : memref<16x32xf32, #tpu.memory_space<vmem>>, vector<8x8xf32>
    tpu.vector_store %arg11[%c0_27, %c8], %50 {strides = array<i32>} : memref<16x32xf32, #tpu.memory_space<vmem>>, vector<8x8xf32>,
    %52 = vector.extract_strided_slice %17 {offsets = [0, 16], sizes = [8, 8], strides = [1, 1]} : vector<8x32xf32> to vector<8x8xf32>
    %53 = vector.extract_strided_slice %18 {offsets = [0, 16], sizes = [8, 8], strides = [1, 1]} : vector<8x32xf32> to vector<8x8xf32>
    %54 = vector.extract_strided_slice %19 {offsets = [0, 16], sizes = [8, 8], strides = [1, 1]} : vector<8x32xf32> to vector<8x8xf32>
    %cst_28 = arith.constant dense<0.000000e+00> : vector<8x8xf32>
    %55 = tpu.matmul %52, %53, %cst_28 {dimension_numbers = #tpu.dot_dimension_numbers<[1], [1], [0], [0], [0, 0, 1, 0], [], []>} : vector<8x8xf32>, vector<8x8xf32>, vector<8x8xf32> -> vector<8x8xf32>
    %cst_29 = arith.constant dense<0xFF800000> : vector<8xf32>
    %56 = vector.multi_reduction <maximumf>, %55, %cst_29 [1] : vector<8x8xf32> to vector<8xf32>
    %57 = vector.shape_cast %56 : vector<8xf32> to vector<8x1xf32>
    %58 = vector.broadcast %57 : vector<8x1xf32> to vector<8x8xf32>
    %59 = arith.subf %55, %58 : vector<8x8xf32>
    %60 = math.exp %59 : vector<8x8xf32>
    %cst_30 = arith.constant dense<0.000000e+00> : vector<8xf32>
    %61 = vector.multi_reduction <add>, %60, %cst_30 [1] : vector<8x8xf32> to vector<8xf32>
    %62 = vector.shape_cast %61 : vector<8xf32> to vector<8x1xf32>
    %63 = tpu.reciprocal %62 {approx = true} : vector<8x1xf32> -> vector<8x1xf32>
    %64 = vector.broadcast %63 : vector<8x1xf32> to vector<8x8xf32>
    %65 = arith.mulf %60, %64 : vector<8x8xf32>
    %cst_31 = arith.constant dense<0.000000e+00> : vector<8x8xf32>
    %66 = tpu.matmul %65, %54, %cst_31 {dimension_numbers = #tpu.dot_dimension_numbers<[1], [0], [0], [1], [0, 0, 1, 1], [], []>} : vector<8x8xf32>, vector<8x8xf32>, vector<8x8xf32> -> vector<8x8xf32>
    %c0_32 = arith.constant 0 : index
    %c16 = arith.constant 16 : index
    %67 = vector.load %arg11[%c0_32, %c16] : memref<16x32xf32, #tpu.memory_space<vmem>>, vector<8x8xf32>
    tpu.vector_store %arg11[%c0_32, %c16], %66 {strides = array<i32>} : memref<16x32xf32, #tpu.memory_space<vmem>>, vector<8x8xf32>,
    %68 = vector.extract_strided_slice %17 {offsets = [0, 24], sizes = [8, 8], strides = [1, 1]} : vector<8x32xf32> to vector<8x8xf32>
    %69 = vector.extract_strided_slice %18 {offsets = [0, 24], sizes = [8, 8], strides = [1, 1]} : vector<8x32xf32> to vector<8x8xf32>
    %70 = vector.extract_strided_slice %19 {offsets = [0, 24], sizes = [8, 8], strides = [1, 1]} : vector<8x32xf32> to vector<8x8xf32>
    %cst_33 = arith.constant dense<0.000000e+00> : vector<8x8xf32>
    %71 = tpu.matmul %68, %69, %cst_33 {dimension_numbers = #tpu.dot_dimension_numbers<[1], [1], [0], [0], [0, 0, 1, 0], [], []>} : vector<8x8xf32>, vector<8x8xf32>, vector<8x8xf32> -> vector<8x8xf32>
    %cst_34 = arith.constant dense<0xFF800000> : vector<8xf32>
    %72 = vector.multi_reduction <maximumf>, %71, %cst_34 [1] : vector<8x8xf32> to vector<8xf32>
    %73 = vector.shape_cast %72 : vector<8xf32> to vector<8x1xf32>
    %74 = vector.broadcast %73 : vector<8x1xf32> to vector<8x8xf32>
    %75 = arith.subf %71, %74 : vector<8x8xf32>
    %76 = math.exp %75 : vector<8x8xf32>
    %cst_35 = arith.constant dense<0.000000e+00> : vector<8xf32>
    %77 = vector.multi_reduction <add>, %76, %cst_35 [1] : vector<8x8xf32> to vector<8xf32>
    %78 = vector.shape_cast %77 : vector<8xf32> to vector<8x1xf32>
    %79 = tpu.reciprocal %78 {approx = true} : vector<8x1xf32> -> vector<8x1xf32>
    %80 = vector.broadcast %79 : vector<8x1xf32> to vector<8x8xf32>
    %81 = arith.mulf %76, %80 : vector<8x8xf32>
    %cst_36 = arith.constant dense<0.000000e+00> : vector<8x8xf32>
    %82 = tpu.matmul %81, %70, %cst_36 {dimension_numbers = #tpu.dot_dimension_numbers<[1], [0], [0], [1], [0, 0, 1, 1], [], []>} : vector<8x8xf32>, vector<8x8xf32>, vector<8x8xf32> -> vector<8x8xf32>
    %c0_37 = arith.constant 0 : index
    %c24 = arith.constant 24 : index
    %83 = vector.load %arg11[%c0_37, %c24] : memref<16x32xf32, #tpu.memory_space<vmem>>, vector<8x8xf32>
    tpu.vector_store %arg11[%c0_37, %c24], %82 {strides = array<i32>} : memref<16x32xf32, #tpu.memory_space<vmem>>, vector<8x8xf32>,
    %84 = vector.extract_strided_slice %16 {offsets = [8, 0], sizes = [8, 32], strides = [1, 1]} : vector<16x32xf32> to vector<8x32xf32>
    %85 = vector.extract_strided_slice %6 {offsets = [8, 0], sizes = [8, 32], strides = [1, 1]} : vector<16x32xf32> to vector<8x32xf32>
    %86 = vector.extract_strided_slice %11 {offsets = [8, 0], sizes = [8, 32], strides = [1, 1]} : vector<16x32xf32> to vector<8x32xf32>
    %87 = vector.extract_strided_slice %84 {offsets = [0, 0], sizes = [8, 8], strides = [1, 1]} : vector<8x32xf32> to vector<8x8xf32>
    %88 = vector.extract_strided_slice %85 {offsets = [0, 0], sizes = [8, 8], strides = [1, 1]} : vector<8x32xf32> to vector<8x8xf32>
    %89 = vector.extract_strided_slice %86 {offsets = [0, 0], sizes = [8, 8], strides = [1, 1]} : vector<8x32xf32> to vector<8x8xf32>
    %cst_38 = arith.constant dense<0.000000e+00> : vector<8x8xf32>
    %90 = tpu.matmul %87, %88, %cst_38 {dimension_numbers = #tpu.dot_dimension_numbers<[1], [1], [0], [0], [0, 0, 1, 0], [], []>} : vector<8x8xf32>, vector<8x8xf32>, vector<8x8xf32> -> vector<8x8xf32>
    %cst_39 = arith.constant dense<0xFF800000> : vector<8xf32>
    %91 = vector.multi_reduction <maximumf>, %90, %cst_39 [1] : vector<8x8xf32> to vector<8xf32>
    %92 = vector.shape_cast %91 : vector<8xf32> to vector<8x1xf32>
    %93 = vector.broadcast %92 : vector<8x1xf32> to vector<8x8xf32>
    %94 = arith.subf %90, %93 : vector<8x8xf32>
    %95 = math.exp %94 : vector<8x8xf32>
    %cst_40 = arith.constant dense<0.000000e+00> : vector<8xf32>
    %96 = vector.multi_reduction <add>, %95, %cst_40 [1] : vector<8x8xf32> to vector<8xf32>
    %97 = vector.shape_cast %96 : vector<8xf32> to vector<8x1xf32>
    %98 = tpu.reciprocal %97 {approx = true} : vector<8x1xf32> -> vector<8x1xf32>
    %99 = vector.broadcast %98 : vector<8x1xf32> to vector<8x8xf32>
    %100 = arith.mulf %95, %99 : vector<8x8xf32>
    %cst_41 = arith.constant dense<0.000000e+00> : vector<8x8xf32>
    %101 = tpu.matmul %100, %89, %cst_41 {dimension_numbers = #tpu.dot_dimension_numbers<[1], [0], [0], [1], [0, 0, 1, 1], [], []>} : vector<8x8xf32>, vector<8x8xf32>, vector<8x8xf32> -> vector<8x8xf32>
    %c8_42 = arith.constant 8 : index
    %c0_43 = arith.constant 0 : index
    %102 = vector.load %arg11[%c8_42, %c0_43] : memref<16x32xf32, #tpu.memory_space<vmem>>, vector<8x8xf32>
    tpu.vector_store %arg11[%c8_42, %c0_43], %101 {strides = array<i32>} : memref<16x32xf32, #tpu.memory_space<vmem>>, vector<8x8xf32>,
    %103 = vector.extract_strided_slice %84 {offsets = [0, 8], sizes = [8, 8], strides = [1, 1]} : vector<8x32xf32> to vector<8x8xf32>
    %104 = vector.extract_strided_slice %85 {offsets = [0, 8], sizes = [8, 8], strides = [1, 1]} : vector<8x32xf32> to vector<8x8xf32>
    %105 = vector.extract_strided_slice %86 {offsets = [0, 8], sizes = [8, 8], strides = [1, 1]} : vector<8x32xf32> to vector<8x8xf32>
    %cst_44 = arith.constant dense<0.000000e+00> : vector<8x8xf32>
    %106 = tpu.matmul %103, %104, %cst_44 {dimension_numbers = #tpu.dot_dimension_numbers<[1], [1], [0], [0], [0, 0, 1, 0], [], []>} : vector<8x8xf32>, vector<8x8xf32>, vector<8x8xf32> -> vector<8x8xf32>
    %cst_45 = arith.constant dense<0xFF800000> : vector<8xf32>
    %107 = vector.multi_reduction <maximumf>, %106, %cst_45 [1] : vector<8x8xf32> to vector<8xf32>
    %108 = vector.shape_cast %107 : vector<8xf32> to vector<8x1xf32>
    %109 = vector.broadcast %108 : vector<8x1xf32> to vector<8x8xf32>
    %110 = arith.subf %106, %109 : vector<8x8xf32>
    %111 = math.exp %110 : vector<8x8xf32>
    %cst_46 = arith.constant dense<0.000000e+00> : vector<8xf32>
    %112 = vector.multi_reduction <add>, %111, %cst_46 [1] : vector<8x8xf32> to vector<8xf32>
    %113 = vector.shape_cast %112 : vector<8xf32> to vector<8x1xf32>
    %114 = tpu.reciprocal %113 {approx = true} : vector<8x1xf32> -> vector<8x1xf32>
    %115 = vector.broadcast %114 : vector<8x1xf32> to vector<8x8xf32>
    %116 = arith.mulf %111, %115 : vector<8x8xf32>
    %cst_47 = arith.constant dense<0.000000e+00> : vector<8x8xf32>
    %117 = tpu.matmul %116, %105, %cst_47 {dimension_numbers = #tpu.dot_dimension_numbers<[1], [0], [0], [1], [0, 0, 1, 1], [], []>} : vector<8x8xf32>, vector<8x8xf32>, vector<8x8xf32> -> vector<8x8xf32>
    %c8_48 = arith.constant 8 : index
    %c8_49 = arith.constant 8 : index
    %118 = vector.load %arg11[%c8_48, %c8_49] : memref<16x32xf32, #tpu.memory_space<vmem>>, vector<8x8xf32>
    tpu.vector_store %arg11[%c8_48, %c8_49], %117 {strides = array<i32>} : memref<16x32xf32, #tpu.memory_space<vmem>>, vector<8x8xf32>,
    %119 = vector.extract_strided_slice %84 {offsets = [0, 16], sizes = [8, 8], strides = [1, 1]} : vector<8x32xf32> to vector<8x8xf32>
    %120 = vector.extract_strided_slice %85 {offsets = [0, 16], sizes = [8, 8], strides = [1, 1]} : vector<8x32xf32> to vector<8x8xf32>
    %121 = vector.extract_strided_slice %86 {offsets = [0, 16], sizes = [8, 8], strides = [1, 1]} : vector<8x32xf32> to vector<8x8xf32>
    %cst_50 = arith.constant dense<0.000000e+00> : vector<8x8xf32>
    %122 = tpu.matmul %119, %120, %cst_50 {dimension_numbers = #tpu.dot_dimension_numbers<[1], [1], [0], [0], [0, 0, 1, 0], [], []>} : vector<8x8xf32>, vector<8x8xf32>, vector<8x8xf32> -> vector<8x8xf32>
    %cst_51 = arith.constant dense<0xFF800000> : vector<8xf32>
    %123 = vector.multi_reduction <maximumf>, %122, %cst_51 [1] : vector<8x8xf32> to vector<8xf32>
    %124 = vector.shape_cast %123 : vector<8xf32> to vector<8x1xf32>
    %125 = vector.broadcast %124 : vector<8x1xf32> to vector<8x8xf32>
    %126 = arith.subf %122, %125 : vector<8x8xf32>
    %127 = math.exp %126 : vector<8x8xf32>
    %cst_52 = arith.constant dense<0.000000e+00> : vector<8xf32>
    %128 = vector.multi_reduction <add>, %127, %cst_52 [1] : vector<8x8xf32> to vector<8xf32>
    %129 = vector.shape_cast %128 : vector<8xf32> to vector<8x1xf32>
    %130 = tpu.reciprocal %129 {approx = true} : vector<8x1xf32> -> vector<8x1xf32>
    %131 = vector.broadcast %130 : vector<8x1xf32> to vector<8x8xf32>
    %132 = arith.mulf %127, %131 : vector<8x8xf32>
    %cst_53 = arith.constant dense<0.000000e+00> : vector<8x8xf32>
    %133 = tpu.matmul %132, %121, %cst_53 {dimension_numbers = #tpu.dot_dimension_numbers<[1], [0], [0], [1], [0, 0, 1, 1], [], []>} : vector<8x8xf32>, vector<8x8xf32>, vector<8x8xf32> -> vector<8x8xf32>
    %c8_54 = arith.constant 8 : index
    %c16_55 = arith.constant 16 : index
    %134 = vector.load %arg11[%c8_54, %c16_55] : memref<16x32xf32, #tpu.memory_space<vmem>>, vector<8x8xf32>
    tpu.vector_store %arg11[%c8_54, %c16_55], %133 {strides = array<i32>} : memref<16x32xf32, #tpu.memory_space<vmem>>, vector<8x8xf32>,
    %135 = vector.extract_strided_slice %84 {offsets = [0, 24], sizes = [8, 8], strides = [1, 1]} : vector<8x32xf32> to vector<8x8xf32>
    %136 = vector.extract_strided_slice %85 {offsets = [0, 24], sizes = [8, 8], strides = [1, 1]} : vector<8x32xf32> to vector<8x8xf32>
    %137 = vector.extract_strided_slice %86 {offsets = [0, 24], sizes = [8, 8], strides = [1, 1]} : vector<8x32xf32> to vector<8x8xf32>
    %cst_56 = arith.constant dense<0.000000e+00> : vector<8x8xf32>
    %138 = tpu.matmul %135, %136, %cst_56 {dimension_numbers = #tpu.dot_dimension_numbers<[1], [1], [0], [0], [0, 0, 1, 0], [], []>} : vector<8x8xf32>, vector<8x8xf32>, vector<8x8xf32> -> vector<8x8xf32>
    %cst_57 = arith.constant dense<0xFF800000> : vector<8xf32>
    %139 = vector.multi_reduction <maximumf>, %138, %cst_57 [1] : vector<8x8xf32> to vector<8xf32>
    %140 = vector.shape_cast %139 : vector<8xf32> to vector<8x1xf32>
    %141 = vector.broadcast %140 : vector<8x1xf32> to vector<8x8xf32>
    %142 = arith.subf %138, %141 : vector<8x8xf32>
    %143 = math.exp %142 : vector<8x8xf32>
    %cst_58 = arith.constant dense<0.000000e+00> : vector<8xf32>
    %144 = vector.multi_reduction <add>, %143, %cst_58 [1] : vector<8x8xf32> to vector<8xf32>
    %145 = vector.shape_cast %144 : vector<8xf32> to vector<8x1xf32>
    %146 = tpu.reciprocal %145 {approx = true} : vector<8x1xf32> -> vector<8x1xf32>
    %147 = vector.broadcast %146 : vector<8x1xf32> to vector<8x8xf32>
    %148 = arith.mulf %143, %147 : vector<8x8xf32>
    %cst_59 = arith.constant dense<0.000000e+00> : vector<8x8xf32>
    %149 = tpu.matmul %148, %137, %cst_59 {dimension_numbers = #tpu.dot_dimension_numbers<[1], [0], [0], [1], [0, 0, 1, 1], [], []>} : vector<8x8xf32>, vector<8x8xf32>, vector<8x8xf32> -> vector<8x8xf32>
    %c8_60 = arith.constant 8 : index
    %c24_61 = arith.constant 24 : index
    %150 = vector.load %arg11[%c8_60, %c24_61] : memref<16x32xf32, #tpu.memory_space<vmem>>, vector<8x8xf32>
    tpu.vector_store %arg11[%c8_60, %c24_61], %149 {strides = array<i32>} : memref<16x32xf32, #tpu.memory_space<vmem>>, vector<8x8xf32>,
    %c0_62 = arith.constant 0 : index
    %c0_63 = arith.constant 0 : index
    %151 = vector.load %arg11[%c0_62, %c0_63] : memref<16x32xf32, #tpu.memory_space<vmem>>, vector<16x32xf32>
    %c0_64 = arith.constant 0 : index
    %c0_65 = arith.constant 0 : index
    %152 = vector.load %arg8[%c0_64, %c0_65] : memref<32x32xf32, #tpu.memory_space<vmem>>, vector<32x32xf32>
    %cst_66 = arith.constant dense<0.000000e+00> : vector<16x32xf32>
    %153 = tpu.matmul %151, %152, %cst_66 {dimension_numbers = #tpu.dot_dimension_numbers<[1], [0], [0], [1], [0, 0, 1, 1], [], []>} : vector<16x32xf32>, vector<32x32xf32>, vector<16x32xf32> -> vector<16x32xf32>
    %c0_67 = arith.constant 0 : index
    %c0_68 = arith.constant 0 : index
    %154 = vector.load %arg9[%c0_67, %c0_68] : memref<1x32xf32, #tpu.memory_space<vmem>>, vector<1x32xf32>
    %155 = vector.broadcast %154 : vector<1x32xf32> to vector<16x32xf32>
    %156 = arith.addf %153, %155 : vector<16x32xf32>
    %c0_69 = arith.constant 0 : index
    %c0_70 = arith.constant 0 : index
    %157 = vector.load %arg10[%c0_69, %c0_70] : memref<16x32xf32, #tpu.memory_space<vmem>>, vector<16x32xf32>
    tpu.vector_store %arg10[%c0_69, %c0_70], %156 {strides = array<i32>} : memref<16x32xf32, #tpu.memory_space<vmem>>, vector<16x32xf32>,
    return
  }
}

</mosaic_0001>

<llo_original>
// kernel: tpu_custom_call.1
$region0: #{tpu_custom_call.1}
  #allocation0 [shape = 'u32[]', space=smem, size = 0x4, offset = 0x4, fixed_abs, tag = 'smem constant byte address 0x4 - core index']
  #allocation1 [shape = 'u32[72,128]{1,0:T(1,128)}', space=vmem, size = 0x9000, scoped, tag = 'internal scratch']
  #allocation2 [shape = 'f32[16,32]{1,0:T(8,128)}', space=vmem, size = 0x2000, scoped, tag = 'scratch operand']
  %s0 = inlined_call_operand.hbm [shape: f32[16,32], index: 0, kind: input, shape index: {}]
  %s1 = inlined_call_operand.hbm [shape: f32[16,32], index: 1, kind: input, shape index: {}]
  %s2 = inlined_call_operand.hbm [shape: f32[32,32], index: 2, kind: input, shape index: {}]
  %s3 = inlined_call_operand.vmem [shape: f32[1,32], index: 3, kind: input, shape index: {}]
  %s4 = inlined_call_operand.hbm [shape: f32[32,32], index: 4, kind: input, shape index: {}]
  %s5 = inlined_call_operand.vmem [shape: f32[1,32], index: 5, kind: input, shape index: {}]
  %s6 = inlined_call_operand.hbm [shape: f32[32,32], index: 6, kind: input, shape index: {}]
  %s7 = inlined_call_operand.vmem [shape: f32[1,32], index: 7, kind: input, shape index: {}]
  %s8 = inlined_call_operand.hbm [shape: f32[32,32], index: 8, kind: input, shape index: {}]
  %s9 = inlined_call_operand.vmem [shape: f32[1,32], index: 9, kind: input, shape index: {}]
  %s10 = inlined_call_operand.hbm [shape: f32[16,32], index: 10, kind: output, shape index: {}]
  %s11 = sld [smem:[#allocation0]]
  $region74: #{tpu_custom_call.1} parent=0
    _
  %s13 = ssub.s32 1, %s11
  %s14 = scalar_select 0, %s13, %s11
  $region1: #{tpu_custom_call.1} parent=0
    #allocation3 [shape = 'u8[8192]{0}', space=vmem, size = 0x2000, scoped, tag = 'input window, operand 0, single buffered']
    #allocation4 [shape = 's32[1]{0}', space=sflag, size = 0x4, scoped, tag = 'scoped memory for tpu_custom_call.1']
    #allocation5 [shape = 's32[1]{0}', space=sflag, size = 0x4, scoped, tag = 'scoped memory for tpu_custom_call.1']
    #allocation6 [shape = 'u8[8192]{0}', space=vmem, size = 0x2000, scoped, tag = 'input window, operand 1, single buffered']
    #allocation7 [shape = 's32[1]{0}', space=sflag, size = 0x4, scoped, tag = 'scoped memory for tpu_custom_call.1']
    #allocation8 [shape = 'u8[16384]{0}', space=vmem, size = 0x4000, scoped, tag = 'input window, operand 2, single buffered']
    #allocation9 [shape = 'u8[16384]{0}', space=vmem, size = 0x4000, scoped, tag = 'input window, operand 4, single buffered']
    #allocation10 [shape = 's32[1]{0}', space=sflag, size = 0x4, scoped, tag = 'scoped memory for tpu_custom_call.1']
    #allocation11 [shape = 'u8[16384]{0}', space=vmem, size = 0x4000, scoped, tag = 'input window, operand 6, single buffered']
    #allocation12 [shape = 'u8[16384]{0}', space=vmem, size = 0x4000, scoped, tag = 'input window, operand 8, single buffered']
    #allocation13 [shape = 's32[1]{0}', space=sflag, size = 0x4, scoped, tag = 'scoped memory for tpu_custom_call.1']
    #allocation14 [shape = 'u8[8192]{0}', space=vmem, size = 0x2000, scoped, tag = 'output window, operand 0, single buffered']
    %15 = vsyncpa [#allocation4], 0
    %16 = vsyncpa [#allocation7], 0
    %17 = vsyncpa [#allocation10], 0
    %18 = vsyncpa [#allocation13], 0
    %19 = vsyncpa [#allocation5], 0
    // Predicated region
    $region2: #{tpu_custom_call.1} parent=1 // pred_check
      _
    $region3: #{tpu_custom_call.1} parent=1 // pred_check_branch
      %21 = sbr.rel (0) target = $region5
    $region4: #{tpu_custom_call.1} parent=1 // pred_region
      %23 = vsyncadd [#allocation4], 0
      %s24 = sshll.u32 %s0, 4
      %s25 = int_to_ptr.hbm [resolvable:$true] %s24
      %s26 = sshll.u32 [#allocation3], 4
      %s27 = int_to_ptr.vmem [resolvable:$true] %s26
      %32 = dma.hbm_to_vmem [thread:$0]  %s25, 256, %s27, [#allocation4], 128, 128, 8
    $region5: #{tpu_custom_call.1} parent=1 // pred_fallthru
      _
    // Predicated region
    $region6: #{tpu_custom_call.1} parent=1 // pred_check
      _
    $region7: #{tpu_custom_call.1} parent=1 // pred_check_branch
      %34 = sbr.rel (0) target = $region9
    $region8: #{tpu_custom_call.1} parent=1 // pred_region
      %36 = vsyncadd [#allocation7], 0
      %s37 = sshll.u32 %s1, 4
      %s38 = int_to_ptr.hbm [resolvable:$true] %s37
      %s39 = sshll.u32 [#allocation6], 4
      %s40 = int_to_ptr.vmem [resolvable:$true] %s39
      %45 = dma.hbm_to_vmem [thread:$0]  %s38, 256, %s40, [#allocation7], 128, 128, 8
    $region9: #{tpu_custom_call.1} parent=1 // pred_fallthru
      _
    // Predicated region
    $region10: #{tpu_custom_call.1} parent=1 // pred_check
      _
    $region11: #{tpu_custom_call.1} parent=1 // pred_check_branch
      %47 = sbr.rel (0) target = $region13
    $region12: #{tpu_custom_call.1} parent=1 // pred_region
      %49 = vsyncadd [#allocation7], 0
      %s50 = sshll.u32 %s2, 4
      %s51 = int_to_ptr.hbm [resolvable:$true] %s50
      %s52 = sshll.u32 [#allocation8], 4
      %s53 = int_to_ptr.vmem [resolvable:$true] %s52
      %58 = dma.hbm_to_vmem [thread:$0]  %s51, 512, %s53, [#allocation7], 128, 128, 8
    $region13: #{tpu_custom_call.1} parent=1 // pred_fallthru
      _
    // Predicated region
    $region14: #{tpu_custom_call.1} parent=1 // pred_check
      _
    $region15: #{tpu_custom_call.1} parent=1 // pred_check_branch
      %60 = sbr.rel (0) target = $region17
    $region16: #{tpu_custom_call.1} parent=1 // pred_region
      _
    $region17: #{tpu_custom_call.1} parent=1 // pred_fallthru
      _
    // Predicated region
    $region18: #{tpu_custom_call.1} parent=1 // pred_check
      _
    $region19: #{tpu_custom_call.1} parent=1 // pred_check_branch
      %62 = sbr.rel (0) target = $region21
    $region20: #{tpu_custom_call.1} parent=1 // pred_region
      %64 = vsyncadd [#allocation10], 0
      %s65 = sshll.u32 %s4, 4
      %s66 = int_to_ptr.hbm [resolvable:$true] %s65
      %s67 = sshll.u32 [#allocation9], 4
      %s68 = int_to_ptr.vmem [resolvable:$true] %s67
      %73 = dma.hbm_to_vmem [thread:$0]  %s66, 512, %s68, [#allocation10], 128, 128, 8
    $region21: #{tpu_custom_call.1} parent=1 // pred_fallthru
      _
    // Predicated region
    $region22: #{tpu_custom_call.1} parent=1 // pred_check
      _
    $region23: #{tpu_custom_call.1} parent=1 // pred_check_branch
      %75 = sbr.rel (0) target = $region25
    $region24: #{tpu_custom_call.1} parent=1 // pred_region
      _
    $region25: #{tpu_custom_call.1} parent=1 // pred_fallthru
      _
    // Predicated region
    $region26: #{tpu_custom_call.1} parent=1 // pred_check
      _
    $region27: #{tpu_custom_call.1} parent=1 // pred_check_branch
      %77 = sbr.rel (0) target = $region29
    $region28: #{tpu_custom_call.1} parent=1 // pred_region
      %79 = vsyncadd [#allocation10], 0
      %s80 = sshll.u32 %s6, 4
      %s81 = int_to_ptr.hbm [resolvable:$true] %s80
      %s82 = sshll.u32 [#allocation11], 4
      %s83 = int_to_ptr.vmem [resolvable:$true] %s82
      %88 = dma.hbm_to_vmem [thread:$0]  %s81, 512, %s83, [#allocation10], 128, 128, 8
    $region29: #{tpu_custom_call.1} parent=1 // pred_fallthru
      _
    // Predicated region
    $region30: #{tpu_custom_call.1} parent=1 // pred_check
      _
    $region31: #{tpu_custom_call.1} parent=1 // pred_check_branch
      %90 = sbr.rel (0) target = $region33
    $region32: #{tpu_custom_call.1} parent=1 // pred_region
      _
    $region33: #{tpu_custom_call.1} parent=1 // pred_fallthru
      _
    // Predicated region
    $region34: #{tpu_custom_call.1} parent=1 // pred_check
      _
    $region35: #{tpu_custom_call.1} parent=1 // pred_check_branch
      %92 = sbr.rel (0) target = $region37
    $region36: #{tpu_custom_call.1} parent=1 // pred_region
      %94 = vsyncadd [#allocation13], 0
      %s95 = sshll.u32 %s8, 4
      %s96 = int_to_ptr.hbm [resolvable:$true] %s95
      %s97 = sshll.u32 [#allocation12], 4
      %s98 = int_to_ptr.vmem [resolvable:$true] %s97
      %103 = dma.hbm_to_vmem [thread:$0]  %s96, 512, %s98, [#allocation13], 128, 128, 8
    $region37: #{tpu_custom_call.1} parent=1 // pred_fallthru
      _
    // Predicated region
    $region38: #{tpu_custom_call.1} parent=1 // pred_check
      _
    $region39: #{tpu_custom_call.1} parent=1 // pred_check_branch
      %105 = sbr.rel (0) target = $region41
    $region40: #{tpu_custom_call.1} parent=1 // pred_region
      _
    $region41: #{tpu_custom_call.1} parent=1 // pred_fallthru
      _
    // Predicated region
    $region42: #{tpu_custom_call.1} parent=1 // pred_check
      _
    $region43: #{tpu_custom_call.1} parent=1 // pred_check_branch
      %107 = sbr.rel (0) target = $region45
    $region44: #{tpu_custom_call.1} parent=1 // pred_region
      %109 = dma.done [#allocation4], 256
    $region45: #{tpu_custom_call.1} parent=1 // pred_fallthru
      _
    // Predicated region
    $region46: #{tpu_custom_call.1} parent=1 // pred_check
      _
    $region47: #{tpu_custom_call.1} parent=1 // pred_check_branch
      %111 = sbr.rel (0) target = $region49
    $region48: #{tpu_custom_call.1} parent=1 // pred_region
      %113 = dma.done [#allocation7], 256
    $region49: #{tpu_custom_call.1} parent=1 // pred_fallthru
      _
    // Predicated region
    $region50: #{tpu_custom_call.1} parent=1 // pred_check
      _
    $region51: #{tpu_custom_call.1} parent=1 // pred_check_branch
      %115 = sbr.rel (0) target = $region53
    $region52: #{tpu_custom_call.1} parent=1 // pred_region
      %117 = dma.done [#allocation7], 512
    $region53: #{tpu_custom_call.1} parent=1 // pred_fallthru
      _
    // Predicated region
    $region54: #{tpu_custom_call.1} parent=1 // pred_check
      _
    $region55: #{tpu_custom_call.1} parent=1 // pred_check_branch
      %119 = sbr.rel (0) target = $region57
    $region56: #{tpu_custom_call.1} parent=1 // pred_region
      %121 = dma.done [#allocation10], 512
    $region57: #{tpu_custom_call.1} parent=1 // pred_fallthru
      _
    // Predicated region
    $region58: #{tpu_custom_call.1} parent=1 // pred_check
      _
    $region59: #{tpu_custom_call.1} parent=1 // pred_check_branch
      %123 = sbr.rel (0) target = $region61
    $region60: #{tpu_custom_call.1} parent=1 // pred_region
      %125 = dma.done [#allocation10], 512
    $region61: #{tpu_custom_call.1} parent=1 // pred_fallthru
      _
    // Predicated region
    $region62: #{tpu_custom_call.1} parent=1 // pred_check
      _
    $region63: #{tpu_custom_call.1} parent=1 // pred_check_branch
      %127 = sbr.rel (0) target = $region65
    $region64: #{tpu_custom_call.1} parent=1 // pred_region
      %129 = dma.done [#allocation13], 512
    $region65: #{tpu_custom_call.1} parent=1 // pred_fallthru
      _
    %v130 = vld [vmem:[#allocation3] sm:$0xff]
    %v131 = vld [vmem:[#allocation3 + $0x8] sm:$0xff]
    %v132 = vld [vmem:[#allocation6] sm:$0xff]
    %v133 = vld [vmem:[#allocation6 + $0x8] sm:$0xff]
    %v134 = vld [vmem:[#allocation8] sm:$0xff]
    %v135 = vld [vmem:[#allocation8 + $0x8] sm:$0xff]
    %v136 = vld [vmem:[#allocation8 + $0x10] sm:$0xff]
    %v137 = vld [vmem:[#allocation8 + $0x18] sm:$0xff]
    %v138 = vld [vmem:[%s3] sm:$0x1]
    %v140 = vperm.slane %v138, 0
    %vm142 = vcmask 261120
    %v144 = vsel %vm142, %v130, 0
    %v147 = vsel %vm142, %v131, 0
    %149 = vmatpush.msra.mxu0 0.0
    %150 = vmatpush.msra.mxu0 0.0
    %151 = vmatpush.msra.mxu0 0.0
    %152 = vmatpush.msra.mxu0 0.0
    %153 = vmatpush.msra.mxu0 0.0
    %154 = vmatpush.msra.mxu0 0.0
    %155 = vmatpush.msra.mxu0 0.0
    %156 = vmatpush.msra.mxu0 0.0
    %157 = vmatpush.msra.mxu0 0.0
    %158 = vmatpush.msra.mxu0 0.0
    %159 = vmatpush.msra.mxu0 0.0
    %160 = vmatpush.msra.mxu0 0.0
    %161 = vmatpush.msra.mxu0 %v137
    %162 = vmatpush.msra.mxu0 %v136
    %163 = vmatpush.msra.mxu0 %v135
    %164 = vmatpush.msra.mxu0 %v134
    %165 = vmatmul.f32.gmra.mxu0 %v144
    %v166 = vpop.f32.mrf.mxu0
    %v167 = vadd.f32 %v140, %v166
    %168 = vmatmul.f32.gmra.mxu0 %v147
    %v169 = vpop.f32.mrf.mxu0
    %v170 = vadd.f32 %v140, %v169
    %171 = vdwg.mxu0
    %v172 = vld [vmem:[#allocation9] sm:$0xff]
    %v173 = vld [vmem:[#allocation9 + $0x8] sm:$0xff]
    %v174 = vld [vmem:[#allocation9 + $0x10] sm:$0xff]
    %v175 = vld [vmem:[#allocation9 + $0x18] sm:$0xff]
    %v176 = vld [vmem:[%s5] sm:$0x1]
    %v178 = vperm.slane %v176, 0
    %180 = vmatpush.msra.mxu0 0.0
    %181 = vmatpush.msra.mxu0 0.0
    %182 = vmatpush.msra.mxu0 0.0
    %183 = vmatpush.msra.mxu0 0.0
    %184 = vmatpush.msra.mxu0 0.0
    %185 = vmatpush.msra.mxu0 0.0
    %186 = vmatpush.msra.mxu0 0.0
    %187 = vmatpush.msra.mxu0 0.0
    %188 = vmatpush.msra.mxu0 0.0
    %189 = vmatpush.msra.mxu0 0.0
    %190 = vmatpush.msra.mxu0 0.0
    %191 = vmatpush.msra.mxu0 0.0
    %192 = vmatpush.msra.mxu0 %v175
    %193 = vmatpush.msra.mxu0 %v174
    %194 = vmatpush.msra.mxu0 %v173
    %195 = vmatpush.msra.mxu0 %v172
    %196 = vmatmul.f32.gmra.mxu0 %v144
    %v197 = vpop.f32.mrf.mxu0
    %v198 = vadd.f32 %v178, %v197
    %199 = vmatmul.f32.gmra.mxu0 %v147
    %v200 = vpop.f32.mrf.mxu0
    %v201 = vadd.f32 %v178, %v200
    %202 = vdwg.mxu0
    %v203 = vld [vmem:[#allocation11] sm:$0xff]
    %v204 = vld [vmem:[#allocation11 + $0x8] sm:$0xff]
    %v205 = vld [vmem:[#allocation11 + $0x10] sm:$0xff]
    %v206 = vld [vmem:[#allocation11 + $0x18] sm:$0xff]
    %v207 = vld [vmem:[%s7] sm:$0x1]
    %v209 = vperm.slane %v207, 0
    %v212 = vsel %vm142, %v132, 0
    %v215 = vsel %vm142, %v133, 0
    %217 = vmatpush.msra.mxu0 0.0
    %218 = vmatpush.msra.mxu0 0.0
    %219 = vmatpush.msra.mxu0 0.0
    %220 = vmatpush.msra.mxu0 0.0
    %221 = vmatpush.msra.mxu0 0.0
    %222 = vmatpush.msra.mxu0 0.0
    %223 = vmatpush.msra.mxu0 0.0
    %224 = vmatpush.msra.mxu0 0.0
    %225 = vmatpush.msra.mxu0 0.0
    %226 = vmatpush.msra.mxu0 0.0
    %227 = vmatpush.msra.mxu0 0.0
    %228 = vmatpush.msra.mxu0 0.0
    %229 = vmatpush.msra.mxu0 %v206
    %230 = vmatpush.msra.mxu0 %v205
    %231 = vmatpush.msra.mxu0 %v204
    %232 = vmatpush.msra.mxu0 %v203
    %233 = vmatmul.f32.gmra.mxu0 %v212
    %v234 = vpop.f32.mrf.mxu0
    %v235 = vadd.f32 %v209, %v234
    %236 = vmatmul.f32.gmra.mxu0 %v215
    %v237 = vpop.f32.mrf.mxu0
    %v238 = vadd.f32 %v209, %v237
    %239 = vdwg.mxu0
    %vm240 = vcmask 64512
    %v242 = vsel %vm240, %v235, 0
    %v245 = vsel %vm240, %v167, 0
    %247 = vmatpush.xpose.msra.mxu0 0.0
    %248 = vmatpush.xpose.msra.mxu0 0.0
    %249 = vmatpush.xpose.msra.mxu0 0.0
    %250 = vmatpush.xpose.msra.mxu0 0.0
    %251 = vmatpush.xpose.msra.mxu0 0.0
    %252 = vmatpush.xpose.msra.mxu0 0.0
    %253 = vmatpush.xpose.msra.mxu0 0.0
    %254 = vmatpush.xpose.msra.mxu0 0.0
    %255 = vmatpush.xpose.msra.mxu0 0.0
    %256 = vmatpush.xpose.msra.mxu0 0.0
    %257 = vmatpush.xpose.msra.mxu0 0.0
    %258 = vmatpush.xpose.msra.mxu0 0.0
    %259 = vmatpush.xpose.msra.mxu0 0.0
    %260 = vmatpush.xpose.msra.mxu0 0.0
    %261 = vmatpush.xpose.msra.mxu0 0.0
    %262 = vmatpush.xpose.msra.mxu0 %v245
    %263 = vmatmul.f32.gmra.mxu0 %v242
    %v264 = vpop.f32.mrf.mxu0
    %v265 = vadd.f32 0.0, %v264
    %266 = vdwg.mxu0
    %v267 = vsel %vm240, %v265, -inf
    %268 = vmax.xlane.f32.xlu0 %v267
    %v269 = vpop.xlane.xlu0 %268
    %v270 = vsub.f32 %v265, %v269
    %v271 = vmul.f32 %v270, 1.442695
    %v272 = vpow.pop %v271
    %v273 = vsel %vm240, %v272, 0.0
    %274 = vadd.xlane.f32.xlu0 %v273
    %v275 = vpop.xlane.xlu0 %274
    %v276 = vrcp.pop %v275
    %v277 = vmul.f32 %v272, %v276
    %v279 = vsel %vm240, %v277, 0
    %281 = vmatpush.msra.mxu0 0.0
    %282 = vmatpush.msra.mxu0 0.0
    %283 = vmatpush.msra.mxu0 0.0
    %284 = vmatpush.msra.mxu0 0.0
    %285 = vmatpush.msra.mxu0 0.0
    %286 = vmatpush.msra.mxu0 0.0
    %287 = vmatpush.msra.mxu0 0.0
    %288 = vmatpush.msra.mxu0 0.0
    %289 = vmatpush.msra.mxu0 0.0
    %290 = vmatpush.msra.mxu0 0.0
    %291 = vmatpush.msra.mxu0 0.0
    %292 = vmatpush.msra.mxu0 0.0
    %293 = vmatpush.msra.mxu0 0.0
    %294 = vmatpush.msra.mxu0 0.0
    %295 = vmatpush.msra.mxu0 0.0
    %296 = vmatpush.msra.mxu0 %v198
    %297 = vmatmul.f32.gmra.mxu0 %v279
    %v298 = vpop.f32.mrf.mxu0
    %v299 = vadd.f32 0.0, %v298
    %300 = vdwg.mxu0
    %301 = vst.msk [vmem:[#allocation2] sm:$0xff] %vm240, %v299
    %302 = vrot.lane.b32.xlu0 %v235, 120
    %v303 = vpop.permute.xlu0 %302
    %304 = vrot.lane.b32.xlu0 %v167, 120
    %v305 = vpop.permute.xlu0 %304
    %v306 = vsel %vm240, %v303, 0
    %v308 = vsel %vm240, %v305, 0
    %310 = vmatpush.xpose.msra.mxu0 0.0
    %311 = vmatpush.xpose.msra.mxu0 0.0
    %312 = vmatpush.xpose.msra.mxu0 0.0
    %313 = vmatpush.xpose.msra.mxu0 0.0
    %314 = vmatpush.xpose.msra.mxu0 0.0
    %315 = vmatpush.xpose.msra.mxu0 0.0
    %316 = vmatpush.xpose.msra.mxu0 0.0
    %317 = vmatpush.xpose.msra.mxu0 0.0
    %318 = vmatpush.xpose.msra.mxu0 0.0
    %319 = vmatpush.xpose.msra.mxu0 0.0
    %320 = vmatpush.xpose.msra.mxu0 0.0
    %321 = vmatpush.xpose.msra.mxu0 0.0
    %322 = vmatpush.xpose.msra.mxu0 0.0
    %323 = vmatpush.xpose.msra.mxu0 0.0
    %324 = vmatpush.xpose.msra.mxu0 0.0
    %325 = vmatpush.xpose.msra.mxu0 %v308
    %326 = vmatmul.f32.gmra.mxu0 %v306
    %v327 = vpop.f32.mrf.mxu0
    %v328 = vadd.f32 0.0, %v327
    %329 = vdwg.mxu0
    %v330 = vsel %vm240, %v328, -inf
    %331 = vmax.xlane.f32.xlu0 %v330
    %v332 = vpop.xlane.xlu0 %331
    %v333 = vsub.f32 %v328, %v332
    %v334 = vmul.f32 %v333, 1.442695
    %v335 = vpow.pop %v334
    %v336 = vsel %vm240, %v335, 0.0
    %337 = vadd.xlane.f32.xlu0 %v336
    %v338 = vpop.xlane.xlu0 %337
    %v339 = vrcp.pop %v338
    %v340 = vmul.f32 %v335, %v339
    %342 = vrot.lane.b32.xlu0 %v198, 120
    %v343 = vpop.permute.xlu0 %342
    %v346 = vsel %vm240, %v340, 0
    %348 = vmatpush.msra.mxu0 0.0
    %349 = vmatpush.msra.mxu0 0.0
    %350 = vmatpush.msra.mxu0 0.0
    %351 = vmatpush.msra.mxu0 0.0
    %352 = vmatpush.msra.mxu0 0.0
    %353 = vmatpush.msra.mxu0 0.0
    %354 = vmatpush.msra.mxu0 0.0
    %355 = vmatpush.msra.mxu0 0.0
    %356 = vmatpush.msra.mxu0 0.0
    %357 = vmatpush.msra.mxu0 0.0
    %358 = vmatpush.msra.mxu0 0.0
    %359 = vmatpush.msra.mxu0 0.0
    %360 = vmatpush.msra.mxu0 0.0
    %361 = vmatpush.msra.mxu0 0.0
    %362 = vmatpush.msra.mxu0 0.0
    %363 = vmatpush.msra.mxu0 %v343
    %364 = vmatmul.f32.gmra.mxu0 %v346
    %v365 = vpop.f32.mrf.mxu0
    %v366 = vadd.f32 0.0, %v365
    %367 = vdwg.mxu0
    %369 = vrot.lane.b32.xlu0 %v366, 8
    %v370 = vpop.permute.xlu0 %369
    %vm372 = vcmask 130112
    %373 = vst.msk [vmem:[#allocation2] sm:$0xff] %vm372, %v370
    %374 = vrot.lane.b32.xlu0 %v235, 112
    %v375 = vpop.permute.xlu0 %374
    %376 = vrot.lane.b32.xlu0 %v167, 112
    %v377 = vpop.permute.xlu0 %376
    %v378 = vsel %vm240, %v375, 0
    %v380 = vsel %vm240, %v377, 0
    %382 = vmatpush.xpose.msra.mxu0 0.0
    %383 = vmatpush.xpose.msra.mxu0 0.0
    %384 = vmatpush.xpose.msra.mxu0 0.0
    %385 = vmatpush.xpose.msra.mxu0 0.0
    %386 = vmatpush.xpose.msra.mxu0 0.0
    %387 = vmatpush.xpose.msra.mxu0 0.0
    %388 = vmatpush.xpose.msra.mxu0 0.0
    %389 = vmatpush.xpose.msra.mxu0 0.0
    %390 = vmatpush.xpose.msra.mxu0 0.0
    %391 = vmatpush.xpose.msra.mxu0 0.0
    %392 = vmatpush.xpose.msra.mxu0 0.0
    %393 = vmatpush.xpose.msra.mxu0 0.0
    %394 = vmatpush.xpose.msra.mxu0 0.0
    %395 = vmatpush.xpose.msra.mxu0 0.0
    %396 = vmatpush.xpose.msra.mxu0 0.0
    %397 = vmatpush.xpose.msra.mxu0 %v380
    %398 = vmatmul.f32.gmra.mxu0 %v378
    %v399 = vpop.f32.mrf.mxu0
    %v400 = vadd.f32 0.0, %v399
    %401 = vdwg.mxu0
    %v402 = vsel %vm240, %v400, -inf
    %403 = vmax.xlane.f32.xlu0 %v402
    %v404 = vpop.xlane.xlu0 %403
    %v405 = vsub.f32 %v400, %v404
    %v406 = vmul.f32 %v405, 1.442695
    %v407 = vpow.pop %v406
    %v408 = vsel %vm240, %v407, 0.0
    %409 = vadd.xlane.f32.xlu0 %v408
    %v410 = vpop.xlane.xlu0 %409
    %v411 = vrcp.pop %v410
    %v412 = vmul.f32 %v407, %v411
    %413 = vrot.lane.b32.xlu0 %v198, 112
    %v414 = vpop.permute.xlu0 %413
    %v417 = vsel %vm240, %v412, 0
    %419 = vmatpush.msra.mxu0 0.0
    %420 = vmatpush.msra.mxu0 0.0
    %421 = vmatpush.msra.mxu0 0.0
    %422 = vmatpush.msra.mxu0 0.0
    %423 = vmatpush.msra.mxu0 0.0
    %424 = vmatpush.msra.mxu0 0.0
    %425 = vmatpush.msra.mxu0 0.0
    %426 = vmatpush.msra.mxu0 0.0
    %427 = vmatpush.msra.mxu0 0.0
    %428 = vmatpush.msra.mxu0 0.0
    %429 = vmatpush.msra.mxu0 0.0
    %430 = vmatpush.msra.mxu0 0.0
    %431 = vmatpush.msra.mxu0 0.0
    %432 = vmatpush.msra.mxu0 0.0
    %433 = vmatpush.msra.mxu0 0.0
    %434 = vmatpush.msra.mxu0 %v414
    %435 = vmatmul.f32.gmra.mxu0 %v417
    %v436 = vpop.f32.mrf.mxu0
    %v437 = vadd.f32 0.0, %v436
    %438 = vdwg.mxu0
    %440 = vrot.lane.b32.xlu0 %v437, 16
    %v441 = vpop.permute.xlu0 %440
    %vm443 = vcmask 195712
    %444 = vst.msk [vmem:[#allocation2] sm:$0xff] %vm443, %v441
    %445 = vrot.lane.b32.xlu0 %v235, 104
    %v446 = vpop.permute.xlu0 %445
    %447 = vrot.lane.b32.xlu0 %v167, 104
    %v448 = vpop.permute.xlu0 %447
    %v449 = vsel %vm240, %v446, 0
    %v451 = vsel %vm240, %v448, 0
    %453 = vmatpush.xpose.msra.mxu0 0.0
    %454 = vmatpush.xpose.msra.mxu0 0.0
    %455 = vmatpush.xpose.msra.mxu0 0.0
    %456 = vmatpush.xpose.msra.mxu0 0.0
    %457 = vmatpush.xpose.msra.mxu0 0.0
    %458 = vmatpush.xpose.msra.mxu0 0.0
    %459 = vmatpush.xpose.msra.mxu0 0.0
    %460 = vmatpush.xpose.msra.mxu0 0.0
    %461 = vmatpush.xpose.msra.mxu0 0.0
    %462 = vmatpush.xpose.msra.mxu0 0.0
    %463 = vmatpush.xpose.msra.mxu0 0.0
    %464 = vmatpush.xpose.msra.mxu0 0.0
    %465 = vmatpush.xpose.msra.mxu0 0.0
    %466 = vmatpush.xpose.msra.mxu0 0.0
    %467 = vmatpush.xpose.msra.mxu0 0.0
    %468 = vmatpush.xpose.msra.mxu0 %v451
    %469 = vmatmul.f32.gmra.mxu0 %v449
    %v470 = vpop.f32.mrf.mxu0
    %v471 = vadd.f32 0.0, %v470
    %472 = vdwg.mxu0
    %v473 = vsel %vm240, %v471, -inf
    %474 = vmax.xlane.f32.xlu0 %v473
    %v475 = vpop.xlane.xlu0 %474
    %v476 = vsub.f32 %v471, %v475
    %v477 = vmul.f32 %v476, 1.442695
    %v478 = vpow.pop %v477
    %v479 = vsel %vm240, %v478, 0.0
    %480 = vadd.xlane.f32.xlu0 %v479
    %v481 = vpop.xlane.xlu0 %480
    %v482 = vrcp.pop %v481
    %v483 = vmul.f32 %v478, %v482
    %484 = vrot.lane.b32.xlu0 %v198, 104
    %v485 = vpop.permute.xlu0 %484
    %v488 = vsel %vm240, %v483, 0
    %490 = vmatpush.msra.mxu0 0.0
    %491 = vmatpush.msra.mxu0 0.0
    %492 = vmatpush.msra.mxu0 0.0
    %493 = vmatpush.msra.mxu0 0.0
    %494 = vmatpush.msra.mxu0 0.0
    %495 = vmatpush.msra.mxu0 0.0
    %496 = vmatpush.msra.mxu0 0.0
    %497 = vmatpush.msra.mxu0 0.0
    %498 = vmatpush.msra.mxu0 0.0
    %499 = vmatpush.msra.mxu0 0.0
    %500 = vmatpush.msra.mxu0 0.0
    %501 = vmatpush.msra.mxu0 0.0
    %502 = vmatpush.msra.mxu0 0.0
    %503 = vmatpush.msra.mxu0 0.0
    %504 = vmatpush.msra.mxu0 0.0
    %505 = vmatpush.msra.mxu0 %v485
    %506 = vmatmul.f32.gmra.mxu0 %v488
    %v507 = vpop.f32.mrf.mxu0
    %v508 = vadd.f32 0.0, %v507
    %509 = vdwg.mxu0
    %511 = vrot.lane.b32.xlu0 %v508, 24
    %v512 = vpop.permute.xlu0 %511
    %vm514 = vcmask 261312
    %515 = vst.msk [vmem:[#allocation2] sm:$0xff] %vm514, %v512
    %v517 = vsel %vm240, %v238, 0
    %v520 = vsel %vm240, %v170, 0
    %522 = vmatpush.xpose.msra.mxu0 0.0
    %523 = vmatpush.xpose.msra.mxu0 0.0
    %524 = vmatpush.xpose.msra.mxu0 0.0
    %525 = vmatpush.xpose.msra.mxu0 0.0
    %526 = vmatpush.xpose.msra.mxu0 0.0
    %527 = vmatpush.xpose.msra.mxu0 0.0
    %528 = vmatpush.xpose.msra.mxu0 0.0
    %529 = vmatpush.xpose.msra.mxu0 0.0
    %530 = vmatpush.xpose.msra.mxu0 0.0
    %531 = vmatpush.xpose.msra.mxu0 0.0
    %532 = vmatpush.xpose.msra.mxu0 0.0
    %533 = vmatpush.xpose.msra.mxu0 0.0
    %534 = vmatpush.xpose.msra.mxu0 0.0
    %535 = vmatpush.xpose.msra.mxu0 0.0
    %536 = vmatpush.xpose.msra.mxu0 0.0
    %537 = vmatpush.xpose.msra.mxu0 %v520
    %538 = vmatmul.f32.gmra.mxu0 %v517
    %v539 = vpop.f32.mrf.mxu0
    %v540 = vadd.f32 0.0, %v539
    %541 = vdwg.mxu0
    %v542 = vsel %vm240, %v540, -inf
    %543 = vmax.xlane.f32.xlu0 %v542
    %v544 = vpop.xlane.xlu0 %543
    %v545 = vsub.f32 %v540, %v544
    %v546 = vmul.f32 %v545, 1.442695
    %v547 = vpow.pop %v546
    %v548 = vsel %vm240, %v547, 0.0
    %549 = vadd.xlane.f32.xlu0 %v548
    %v550 = vpop.xlane.xlu0 %549
    %v551 = vrcp.pop %v550
    %v552 = vmul.f32 %v547, %v551
    %v554 = vsel %vm240, %v552, 0
    %556 = vmatpush.msra.mxu0 0.0
    %557 = vmatpush.msra.mxu0 0.0
    %558 = vmatpush.msra.mxu0 0.0
    %559 = vmatpush.msra.mxu0 0.0
    %560 = vmatpush.msra.mxu0 0.0
    %561 = vmatpush.msra.mxu0 0.0
    %562 = vmatpush.msra.mxu0 0.0
    %563 = vmatpush.msra.mxu0 0.0
    %564 = vmatpush.msra.mxu0 0.0
    %565 = vmatpush.msra.mxu0 0.0
    %566 = vmatpush.msra.mxu0 0.0
    %567 = vmatpush.msra.mxu0 0.0
    %568 = vmatpush.msra.mxu0 0.0
    %569 = vmatpush.msra.mxu0 0.0
    %570 = vmatpush.msra.mxu0 0.0
    %571 = vmatpush.msra.mxu0 %v201
    %572 = vmatmul.f32.gmra.mxu0 %v554
    %v573 = vpop.f32.mrf.mxu0
    %v574 = vadd.f32 0.0, %v573
    %575 = vdwg.mxu0
    %576 = vst.msk [vmem:[#allocation2 + $0x8] sm:$0xff] %vm240, %v574
    %577 = vrot.lane.b32.xlu0 %v238, 120
    %v578 = vpop.permute.xlu0 %577
    %579 = vrot.lane.b32.xlu0 %v170, 120
    %v580 = vpop.permute.xlu0 %579
    %v581 = vsel %vm240, %v578, 0
    %v583 = vsel %vm240, %v580, 0
    %585 = vmatpush.xpose.msra.mxu0 0.0
    %586 = vmatpush.xpose.msra.mxu0 0.0
    %587 = vmatpush.xpose.msra.mxu0 0.0
    %588 = vmatpush.xpose.msra.mxu0 0.0
    %589 = vmatpush.xpose.msra.mxu0 0.0
    %590 = vmatpush.xpose.msra.mxu0 0.0
    %591 = vmatpush.xpose.msra.mxu0 0.0
    %592 = vmatpush.xpose.msra.mxu0 0.0
    %593 = vmatpush.xpose.msra.mxu0 0.0
    %594 = vmatpush.xpose.msra.mxu0 0.0
    %595 = vmatpush.xpose.msra.mxu0 0.0
    %596 = vmatpush.xpose.msra.mxu0 0.0
    %597 = vmatpush.xpose.msra.mxu0 0.0
    %598 = vmatpush.xpose.msra.mxu0 0.0
    %599 = vmatpush.xpose.msra.mxu0 0.0
    %600 = vmatpush.xpose.msra.mxu0 %v583
    %601 = vmatmul.f32.gmra.mxu0 %v581
    %v602 = vpop.f32.mrf.mxu0
    %v603 = vadd.f32 0.0, %v602
    %604 = vdwg.mxu0
    %v605 = vsel %vm240, %v603, -inf
    %606 = vmax.xlane.f32.xlu0 %v605
    %v607 = vpop.xlane.xlu0 %606
    %v608 = vsub.f32 %v603, %v607
    %v609 = vmul.f32 %v608, 1.442695
    %v610 = vpow.pop %v609
    %v611 = vsel %vm240, %v610, 0.0
    %612 = vadd.xlane.f32.xlu0 %v611
    %v613 = vpop.xlane.xlu0 %612
    %v614 = vrcp.pop %v613
    %v615 = vmul.f32 %v610, %v614
    %617 = vrot.lane.b32.xlu0 %v201, 120
    %v618 = vpop.permute.xlu0 %617
    %v621 = vsel %vm240, %v615, 0
    %623 = vmatpush.msra.mxu0 0.0
    %624 = vmatpush.msra.mxu0 0.0
    %625 = vmatpush.msra.mxu0 0.0
    %626 = vmatpush.msra.mxu0 0.0
    %627 = vmatpush.msra.mxu0 0.0
    %628 = vmatpush.msra.mxu0 0.0
    %629 = vmatpush.msra.mxu0 0.0
    %630 = vmatpush.msra.mxu0 0.0
    %631 = vmatpush.msra.mxu0 0.0
    %632 = vmatpush.msra.mxu0 0.0
    %633 = vmatpush.msra.mxu0 0.0
    %634 = vmatpush.msra.mxu0 0.0
    %635 = vmatpush.msra.mxu0 0.0
    %636 = vmatpush.msra.mxu0 0.0
    %637 = vmatpush.msra.mxu0 0.0
    %638 = vmatpush.msra.mxu0 %v618
    %639 = vmatmul.f32.gmra.mxu0 %v621
    %v640 = vpop.f32.mrf.mxu0
    %v641 = vadd.f32 0.0, %v640
    %642 = vdwg.mxu0
    %644 = vrot.lane.b32.xlu0 %v641, 8
    %v645 = vpop.permute.xlu0 %644
    %647 = vst.msk [vmem:[#allocation2 + $0x8] sm:$0xff] %vm372, %v645
    %648 = vrot.lane.b32.xlu0 %v238, 112
    %v649 = vpop.permute.xlu0 %648
    %650 = vrot.lane.b32.xlu0 %v170, 112
    %v651 = vpop.permute.xlu0 %650
    %v652 = vsel %vm240, %v649, 0
    %v654 = vsel %vm240, %v651, 0
    %656 = vmatpush.xpose.msra.mxu0 0.0
    %657 = vmatpush.xpose.msra.mxu0 0.0
    %658 = vmatpush.xpose.msra.mxu0 0.0
    %659 = vmatpush.xpose.msra.mxu0 0.0
    %660 = vmatpush.xpose.msra.mxu0 0.0
    %661 = vmatpush.xpose.msra.mxu0 0.0
    %662 = vmatpush.xpose.msra.mxu0 0.0
    %663 = vmatpush.xpose.msra.mxu0 0.0
    %664 = vmatpush.xpose.msra.mxu0 0.0
    %665 = vmatpush.xpose.msra.mxu0 0.0
    %666 = vmatpush.xpose.msra.mxu0 0.0
    %667 = vmatpush.xpose.msra.mxu0 0.0
    %668 = vmatpush.xpose.msra.mxu0 0.0
    %669 = vmatpush.xpose.msra.mxu0 0.0
    %670 = vmatpush.xpose.msra.mxu0 0.0
    %671 = vmatpush.xpose.msra.mxu0 %v654
    %672 = vmatmul.f32.gmra.mxu0 %v652
    %v673 = vpop.f32.mrf.mxu0
    %v674 = vadd.f32 0.0, %v673
    %675 = vdwg.mxu0
    %v676 = vsel %vm240, %v674, -inf
    %677 = vmax.xlane.f32.xlu0 %v676
    %v678 = vpop.xlane.xlu0 %677
    %v679 = vsub.f32 %v674, %v678
    %v680 = vmul.f32 %v679, 1.442695
    %v681 = vpow.pop %v680
    %v682 = vsel %vm240, %v681, 0.0
    %683 = vadd.xlane.f32.xlu0 %v682
    %v684 = vpop.xlane.xlu0 %683
    %v685 = vrcp.pop %v684
    %v686 = vmul.f32 %v681, %v685
    %687 = vrot.lane.b32.xlu0 %v201, 112
    %v688 = vpop.permute.xlu0 %687
    %v691 = vsel %vm240, %v686, 0
    %693 = vmatpush.msra.mxu0 0.0
    %694 = vmatpush.msra.mxu0 0.0
    %695 = vmatpush.msra.mxu0 0.0
    %696 = vmatpush.msra.mxu0 0.0
    %697 = vmatpush.msra.mxu0 0.0
    %698 = vmatpush.msra.mxu0 0.0
    %699 = vmatpush.msra.mxu0 0.0
    %700 = vmatpush.msra.mxu0 0.0
    %701 = vmatpush.msra.mxu0 0.0
    %702 = vmatpush.msra.mxu0 0.0
    %703 = vmatpush.msra.mxu0 0.0
    %704 = vmatpush.msra.mxu0 0.0
    %705 = vmatpush.msra.mxu0 0.0
    %706 = vmatpush.msra.mxu0 0.0
    %707 = vmatpush.msra.mxu0 0.0
    %708 = vmatpush.msra.mxu0 %v688
    %709 = vmatmul.f32.gmra.mxu0 %v691
    %v710 = vpop.f32.mrf.mxu0
    %v711 = vadd.f32 0.0, %v710
    %712 = vdwg.mxu0
    %714 = vrot.lane.b32.xlu0 %v711, 16
    %v715 = vpop.permute.xlu0 %714
    %717 = vst.msk [vmem:[#allocation2 + $0x8] sm:$0xff] %vm443, %v715
    %718 = vrot.lane.b32.xlu0 %v238, 104
    %v719 = vpop.permute.xlu0 %718
    %720 = vrot.lane.b32.xlu0 %v170, 104
    %v721 = vpop.permute.xlu0 %720
    %v722 = vsel %vm240, %v719, 0
    %v724 = vsel %vm240, %v721, 0
    %726 = vmatpush.xpose.msra.mxu0 0.0
    %727 = vmatpush.xpose.msra.mxu0 0.0
    %728 = vmatpush.xpose.msra.mxu0 0.0
    %729 = vmatpush.xpose.msra.mxu0 0.0
    %730 = vmatpush.xpose.msra.mxu0 0.0
    %731 = vmatpush.xpose.msra.mxu0 0.0
    %732 = vmatpush.xpose.msra.mxu0 0.0
    %733 = vmatpush.xpose.msra.mxu0 0.0
    %734 = vmatpush.xpose.msra.mxu0 0.0
    %735 = vmatpush.xpose.msra.mxu0 0.0
    %736 = vmatpush.xpose.msra.mxu0 0.0
    %737 = vmatpush.xpose.msra.mxu0 0.0
    %738 = vmatpush.xpose.msra.mxu0 0.0
    %739 = vmatpush.xpose.msra.mxu0 0.0
    %740 = vmatpush.xpose.msra.mxu0 0.0
    %741 = vmatpush.xpose.msra.mxu0 %v724
    %742 = vmatmul.f32.gmra.mxu0 %v722
    %v743 = vpop.f32.mrf.mxu0
    %v744 = vadd.f32 0.0, %v743
    %745 = vdwg.mxu0
    %v746 = vsel %vm240, %v744, -inf
    %747 = vmax.xlane.f32.xlu0 %v746
    %v748 = vpop.xlane.xlu0 %747
    %v749 = vsub.f32 %v744, %v748
    %v750 = vmul.f32 %v749, 1.442695
    %v751 = vpow.pop %v750
    %v752 = vsel %vm240, %v751, 0.0
    %753 = vadd.xlane.f32.xlu0 %v752
    %v754 = vpop.xlane.xlu0 %753
    %v755 = vrcp.pop %v754
    %v756 = vmul.f32 %v751, %v755
    %757 = vrot.lane.b32.xlu0 %v201, 104
    %v758 = vpop.permute.xlu0 %757
    %v761 = vsel %vm240, %v756, 0
    %763 = vmatpush.msra.mxu0 0.0
    %764 = vmatpush.msra.mxu0 0.0
    %765 = vmatpush.msra.mxu0 0.0
    %766 = vmatpush.msra.mxu0 0.0
    %767 = vmatpush.msra.mxu0 0.0
    %768 = vmatpush.msra.mxu0 0.0
    %769 = vmatpush.msra.mxu0 0.0
    %770 = vmatpush.msra.mxu0 0.0
    %771 = vmatpush.msra.mxu0 0.0
    %772 = vmatpush.msra.mxu0 0.0
    %773 = vmatpush.msra.mxu0 0.0
    %774 = vmatpush.msra.mxu0 0.0
    %775 = vmatpush.msra.mxu0 0.0
    %776 = vmatpush.msra.mxu0 0.0
    %777 = vmatpush.msra.mxu0 0.0
    %778 = vmatpush.msra.mxu0 %v758
    %779 = vmatmul.f32.gmra.mxu0 %v761
    %v780 = vpop.f32.mrf.mxu0
    %v781 = vadd.f32 0.0, %v780
    %782 = vdwg.mxu0
    %784 = vrot.lane.b32.xlu0 %v781, 24
    %v785 = vpop.permute.xlu0 %784
    %787 = vst.msk [vmem:[#allocation2 + $0x8] sm:$0xff] %vm514, %v785
    %v788 = vld [vmem:[#allocation2] sm:$0xff]
    %v789 = vld [vmem:[#allocation2 + $0x8] sm:$0xff]
    %v790 = vld [vmem:[#allocation12] sm:$0xff]
    %v791 = vld [vmem:[#allocation12 + $0x8] sm:$0xff]
    %v792 = vld [vmem:[#allocation12 + $0x10] sm:$0xff]
    %v793 = vld [vmem:[#allocation12 + $0x18] sm:$0xff]
    %v794 = vld [vmem:[%s9] sm:$0x1]
    %v796 = vperm.slane %v794, 0
    %v799 = vsel %vm142, %v788, 0
    %v802 = vsel %vm142, %v789, 0
    %804 = vmatpush.msra.mxu0 0.0
    %805 = vmatpush.msra.mxu0 0.0
    %806 = vmatpush.msra.mxu0 0.0
    %807 = vmatpush.msra.mxu0 0.0
    %808 = vmatpush.msra.mxu0 0.0
    %809 = vmatpush.msra.mxu0 0.0
    %810 = vmatpush.msra.mxu0 0.0
    %811 = vmatpush.msra.mxu0 0.0
    %812 = vmatpush.msra.mxu0 0.0
    %813 = vmatpush.msra.mxu0 0.0
    %814 = vmatpush.msra.mxu0 0.0
    %815 = vmatpush.msra.mxu0 0.0
    %816 = vmatpush.msra.mxu0 %v793
    %817 = vmatpush.msra.mxu0 %v792
    %818 = vmatpush.msra.mxu0 %v791
    %819 = vmatpush.msra.mxu0 %v790
    %820 = vmatmul.f32.gmra.mxu0 %v799
    %v821 = vpop.f32.mrf.mxu0
    %v822 = vadd.f32 %v796, %v821
    %823 = vmatmul.f32.gmra.mxu0 %v802
    %v824 = vpop.f32.mrf.mxu0
    %v825 = vadd.f32 %v796, %v824
    %826 = vdwg.mxu0
    %827 = vst.msk [vmem:[#allocation14] sm:$0xff] %vm142, %v822
    %828 = vst.msk [vmem:[#allocation14 + $0x8] sm:$0xff] %vm142, %v825
    // Predicated region
    $region66: #{tpu_custom_call.1} parent=1 // pred_check
      _
    $region67: #{tpu_custom_call.1} parent=1 // pred_check_branch
      %830 = sbr.rel (0) target = $region69
    $region68: #{tpu_custom_call.1} parent=1 // pred_region
      %832 = vsyncadd [#allocation5], 0
      %s833 = sshll.u32 [#allocation14], 4
      %s834 = int_to_ptr.vmem [resolvable:$true] %s833
      %s835 = sshll.u32 %s10, 4
      %s836 = int_to_ptr.hbm [resolvable:$true] %s835
      %841 = dma.vmem_to_hbm [thread:$0]  %s834, 256, %s836, [#allocation5], 128, 128, 8
    $region69: #{tpu_custom_call.1} parent=1 // pred_fallthru
      _
    // Predicated region
    $region70: #{tpu_custom_call.1} parent=1 // pred_check
      _
    $region71: #{tpu_custom_call.1} parent=1 // pred_check_branch
      %843 = sbr.rel (0) target = $region73
    $region72: #{tpu_custom_call.1} parent=1 // pred_region
      %845 = dma.done [#allocation5], 256
    $region73: #{tpu_custom_call.1} parent=1 // pred_fallthru
      _
    %846 = vsyncpa [#allocation4], 1
    %847 = vsyncpa [#allocation7], 1
    %848 = vsyncpa [#allocation10], 1
    %849 = vsyncpa [#allocation13], 1
    %850 = vsyncpa [#allocation5], 1

</llo_original>
